<compile_context>
chip_gen: v7x
topology: tpu7x:2x2x1
jax: 0.10.0
libtpu: 0.0.40
codegen_flags: <defaults>
</compile_context>

<pallas_src>
import functools

import jax
import jax.numpy as jnp
from jax.experimental import pallas as pl
from jax.experimental.pallas import tpu as pltpu

_LANE = 128
_SUBLANE = 8


def _round_up(x, m):
    return (x + m - 1) // m * m


def _vgan_disc_kernel(n_hidden, wgan, use_bf16,
                      z_ref, w_in_ref, b_in_ref,
                      w_h_ref, b_h_ref,
                      w_out_t_ref, b_out_ref,
                      o_ref, h_ref):
    """One grid step = one hidden layer for one batch tile.

    The input layer runs on the first layer step, the output head on the
    last; h_ref (VMEM scratch) carries the activation across layer steps.
    """
    l = pl.program_id(1)
    n_l = pl.num_programs(1)
    cd = jnp.bfloat16 if use_bf16 else jnp.float32

    # ---- input layer (first layer step of each batch tile) ---------------
    @pl.when(l == 0)
    def _():
        h = jnp.dot(z_ref[...].astype(cd), w_in_ref[...].astype(cd),
                    preferred_element_type=jnp.float32) + b_in_ref[...]
        h_ref[...] = jnp.maximum(h, 0.0)
        # TODO(synk): nn.Dropout(p=0.5) is stochastic in train mode; the
        # eval-mode identity is used for a deterministic forward.

    # ---- hidden layer `l` with the streamed (1, H, H) weight block -------
    if n_hidden > 0:
        hh = jnp.dot(h_ref[...].astype(cd), w_h_ref[0].astype(cd),
                     preferred_element_type=jnp.float32)
        hh = hh + b_h_ref[pl.ds(l, 1), :]
        h_ref[...] = jnp.maximum(hh, 0.0)

    # ---- output head (last layer step) ------------------------------------
    # N=1, so an MXU pass would be almost pure drain latency: VPU multiply +
    # XLU lane reduce instead, stored lane-dense as a (1, tile_b) row.
    @pl.when(l == n_l - 1)
    def _():
        row = jnp.sum(h_ref[...] * w_out_t_ref[...], axis=-1) + b_out_ref[0, 0]
        if not wgan:
            row = jax.nn.sigmoid(row)
        o_ref[...] = row[None, :].astype(o_ref.dtype)


def vgan_discriminator_forward(z, params, c=None, *, wgan=False,
                               use_bf16=True, max_tile_b=512):
    """Fused MLP discriminator forward.

    z: (B, x_dim) float32; c: optional (B, c_dim) condition (concatenated).
    params (kernel-ready layout, see init_params):
      w_in (in_dim, H), b_in (1, H), w_h (L, H, H), b_h (L, H),
      w_out_t (1, H), b_out (1, 1).
    Returns (B, 1) float32.
    """
    if c is not None:
        z = jnp.concatenate([z, c], axis=1)
    B, in_dim = z.shape
    w_in, b_in = params["w_in"], params["b_in"]
    w_h, b_h = params["w_h"], params["b_h"]
    w_out_t, b_out = params["w_out_t"], params["b_out"]
    L, H = w_h.shape[0], w_in.shape[1]
    assert w_in.shape == (in_dim, H), (w_in.shape, in_dim, H)

    # ---- batch tiling ------------------------------------------------------
    B8 = _round_up(B, _SUBLANE)
    if B8 < 2 * _LANE:
        # Small batch: one tile -> the layer-weight stream runs exactly once.
        tile_b = B8
    else:
        # Large batch: >=2 lane-aligned (multiple-of-128) tiles so the
        # "parallel" batch axis shards across v7x's two TensorCores and the
        # lane-dense output block stays unmasked.
        tile_b = min(_round_up(max_tile_b, _LANE),
                     _round_up(-(-B8 // 2), _LANE))
    Bp = _round_up(B8, tile_b)
    grid_b = Bp // tile_b

    z_p = z if Bp == B else jnp.pad(z, ((0, Bp - B), (0, 0)))

    n_hidden = L
    n_l = max(L, 1)
    if L == 0:
        # Dummy single layer block so the streamed-weight BlockSpec is valid;
        # the kernel statically skips the hidden matmul.
        w_h = jnp.zeros((1, H, H), w_h.dtype)
        b_h = jnp.zeros((1, H), jnp.float32)

    b_in = b_in.astype(jnp.float32)
    b_h = b_h.astype(jnp.float32)
    w_out_t = w_out_t.astype(jnp.float32)
    b_out = b_out.astype(jnp.float32)
    if use_bf16:
        # Halves matmul-operand DMA and doubles MXU throughput.  Accumulate,
        # biases, relu, the output reduce and sigmoid all stay f32.
        # (Callers running many steps can pre-cast/caches these once.)
        z_p = z_p.astype(jnp.bfloat16)
        w_in = w_in.astype(jnp.bfloat16)
        w_h = w_h.astype(jnp.bfloat16)

    # ---- scoped-VMEM budget (generation aware) -----------------------------
    itemsize = 2 if use_bf16 else 4
    needed = (2 * H * H * itemsize              # streamed w_h (double buffered)
              + 2 * in_dim * H * itemsize       # resident w_in
              + 2 * tile_b * in_dim * itemsize  # z tiles
              + tile_b * H * 4                  # carried activation scratch
              + 2 * (n_l + 2) * H * 4           # biases + w_out row
              + 2 * tile_b * 4                  # output row
              + (2 << 20))                      # headroom / compiler scratch
    vmem_limit = None
    if needed > (16 << 20):                     # v5e's default scoped limit
        try:
            phys = pltpu.get_tpu_info().vmem_capacity_bytes
        except Exception:
            phys = 64 << 20                     # v7x physical VMEM (smallest)
        vmem_limit = int(min(needed, phys * 3 // 4))

    kernel = functools.partial(_vgan_disc_kernel, n_hidden, wgan, use_bf16)

    out_row = pl.pallas_call(
        kernel,
        out_shape=jax.ShapeDtypeStruct((1, Bp), jnp.float32),
        grid_spec=pltpu.PrefetchScalarGridSpec(
            num_scalar_prefetch=0,
            grid=(grid_b, n_l),        # batch tiles x layers (layers innermost)
            in_specs=[
                pl.BlockSpec((tile_b, in_dim), lambda i, l: (i, 0)),   # z tile
                # Constant-index (resident) params: DMA'd once per batch tile.
                # NOTE: pipeline_mode=pl.Buffered(1) would single-buffer these;
                # skipped because their footprint is negligible once the big
                # w_h stack is streamed.
                pl.BlockSpec((in_dim, H), lambda i, l: (0, 0)),        # w_in
                pl.BlockSpec((1, H), lambda i, l: (0, 0)),             # b_in
                # Streamed hidden-layer weights: one (H, H) block per step,
                # double-buffered so layer l+1's DMA hides under layer l.
                pl.BlockSpec((1, H, H), lambda i, l: (l, 0, 0)),       # w_h[l]
                pl.BlockSpec((n_l, H), lambda i, l: (0, 0)),           # b_h (tiny)
                pl.BlockSpec((1, H), lambda i, l: (0, 0)),             # w_out^T
                pl.BlockSpec(memory_space=pltpu.MemorySpace.SMEM),     # b_out
            ],
            out_specs=pl.BlockSpec((1, tile_b), lambda i, l: (0, i)),
            scratch_shapes=[pltpu.VMEM((tile_b, H), jnp.float32)],
        ),
        compiler_params=pltpu.CompilerParams(
            dimension_semantics=("parallel", "arbitrary"),
            vmem_limit_bytes=vmem_limit),
    )(z_p, w_in, b_in, w_h, b_h, w_out_t, b_out)

    return out_row[0, :B].reshape(B, 1)


def init_params(key, x_dim, hidden_dim, layers, c_dim=0):
    """Deterministic params in kernel-ready layout: weights pre-transposed to
    (in, out); hidden biases stacked as (L, H)."""
    ks = jax.random.split(key, 6)
    in_dim = x_dim + c_dim
    s = 0.1
    return {
        "w_in": s * jax.random.normal(ks[0], (in_dim, hidden_dim), jnp.float32),
        "b_in": s * jax.random.normal(ks[1], (1, hidden_dim), jnp.float32),
        "w_h": s * jax.random.normal(ks[2], (layers, hidden_dim, hidden_dim),
                                     jnp.float32),
        "b_h": s * jax.random.normal(ks[3], (layers, hidden_dim), jnp.float32),
        "w_out_t": s * jax.random.normal(ks[4], (1, hidden_dim), jnp.float32),
        "b_out": s * jax.random.normal(ks[5], (1, 1), jnp.float32),
    }


def reference_forward(z, params, wgan=False):
    h = jnp.maximum(z @ params["w_in"] + params["b_in"], 0.0)
    for i in range(params["w_h"].shape[0]):
        h = jnp.maximum(h @ params["w_h"][i] + params["b_h"][i], 0.0)
    out = h @ params["w_out_t"].T + params["b_out"]
    return out if wgan else jax.nn.sigmoid(out)


if __name__ == "__main__":
    # Shapes implied by the module: x_dim=32, hidden_dim=32, layers=2,
    # condition=False (c_dim=0), wgan=False, batch=16.
    x_dim, hidden_dim, layers, batch = 32, 32, 2, 16

    key = jax.random.PRNGKey(0)
    k_z, k_p = jax.random.split(key)
    z = jax.random.normal(k_z, (batch, x_dim), jnp.float32)
    params = init_params(k_p, x_dim, hidden_dim, layers)

    ref = reference_forward(z, params, wgan=False)

    # f32 matmul path: exact (modulo accumulation order) vs. the JAX reference.
    out_f32 = jax.block_until_ready(
        vgan_discriminator_forward(z, params, wgan=False, use_bf16=False))
    assert out_f32.shape == (batch, 1)
    assert jnp.allclose(out_f32, ref, atol=1e-5, rtol=1e-5), "f32 mismatch"

    # Default path: bf16 matmul inputs, f32 accumulate / bias / relu / sigmoid.
    out_def = jax.block_until_ready(
        vgan_discriminator_forward(z, params, wgan=False))
    assert out_def.shape == (batch, 1)
    assert jnp.allclose(out_def, ref, atol=5e-2), "bf16 mismatch"

    print("KERNEL_OK")
</pallas_src>

<mosaic_0001>
module attributes {stable_mosaic.version = 11 : i64} {
  func.func @_vgan_disc_kernel(%arg0: i32, %arg1: i32, %arg2: memref<16x32xf32, #tpu.memory_space<vmem>>, %arg3: memref<32x32xf32, #tpu.memory_space<vmem>>, %arg4: memref<1x32xf32, #tpu.memory_space<vmem>>, %arg5: memref<1x32x32xf32, #tpu.memory_space<vmem>>, %arg6: memref<2x32xf32, #tpu.memory_space<vmem>>, %arg7: memref<1x32xf32, #tpu.memory_space<vmem>>, %arg8: memref<1x1xf32, #tpu.memory_space<smem>>, %arg9: memref<1x16xf32, #tpu.memory_space<vmem>>, %arg10: memref<16x32xf32, #tpu.memory_space<vmem>>) attributes {dimension_semantics = [#tpu.dimension_semantics<parallel>, #tpu.dimension_semantics<arbitrary>], iteration_bounds = array<i64: 1, 2>, scalar_prefetch = 0 : i64, scratch_operands = 1 : i64, tpu.core_type = #tpu.core_type<tc>, window_params = [{transform_indices = @transform_0, window_bounds = array<i64: 16, 32>}, {pipeline_mode = #tpu.pipeline_mode<synchronous>, transform_indices = @transform_1, window_bounds = array<i64: 32, 32>}, {pipeline_mode = #tpu.pipeline_mode<synchronous>, transform_indices = @transform_2, window_bounds = array<i64: 1, 32>}, {transform_indices = @transform_3, window_bounds = array<i64: 1, 32, 32>}, {pipeline_mode = #tpu.pipeline_mode<synchronous>, transform_indices = @transform_4, window_bounds = array<i64: 2, 32>}, {pipeline_mode = #tpu.pipeline_mode<synchronous>, transform_indices = @transform_5, window_bounds = array<i64: 1, 32>}, {transform_indices = @transform_6, window_bounds = array<i64: 1, 1>}, {transform_indices = @transform_7, window_bounds = array<i64: 1, 16>}]} {
    %c0_i32 = arith.constant 0 : i32
    %0 = arith.cmpi eq, %arg1, %c0_i32 : i32
    %1 = arith.extui %0 : i1 to i32
    %c0_i32_0 = arith.constant 0 : i32
    %2 = arith.cmpi ne, %1, %c0_i32_0 : i32
    scf.if %2 {
      %c0_10 = arith.constant 0 : index
      %c0_11 = arith.constant 0 : index
      %17 = vector.load %arg2[%c0_10, %c0_11] : memref<16x32xf32, #tpu.memory_space<vmem>>, vector<16x32xf32>
      %c0_12 = arith.constant 0 : index
      %c0_13 = arith.constant 0 : index
      %18 = vector.load %arg3[%c0_12, %c0_13] : memref<32x32xf32, #tpu.memory_space<vmem>>, vector<32x32xf32>
      %cst_14 = arith.constant dense<0.000000e+00> : vector<16x32xf32>
      %19 = tpu.matmul %17, %18, %cst_14 {dimension_numbers = #tpu.dot_dimension_numbers<[1], [0], [0], [1], [0, 0, 1, 1], [], []>} : vector<16x32xf32>, vector<32x32xf32>, vector<16x32xf32> -> vector<16x32xf32>
      %c0_15 = arith.constant 0 : index
      %c0_16 = arith.constant 0 : index
      %20 = vector.load %arg4[%c0_15, %c0_16] : memref<1x32xf32, #tpu.memory_space<vmem>>, vector<1x32xf32>
      %21 = vector.broadcast %20 : vector<1x32xf32> to vector<16x32xf32>
      %22 = arith.addf %19, %21 : vector<16x32xf32>
      %cst_17 = arith.constant 0.000000e+00 : f32
      %23 = vector.broadcast %cst_17 : f32 to vector<16x32xf32>
      %24 = arith.maximumf %22, %23 : vector<16x32xf32>
      %c0_18 = arith.constant 0 : index
      %c0_19 = arith.constant 0 : index
      %25 = vector.load %arg10[%c0_18, %c0_19] : memref<16x32xf32, #tpu.memory_space<vmem>>, vector<16x32xf32>
      tpu.vector_store %arg10[%c0_18, %c0_19], %24 {strides = array<i32>} : memref<16x32xf32, #tpu.memory_space<vmem>>, vector<16x32xf32>,
    } else {
    }
    %c0 = arith.constant 0 : index
    %c0_1 = arith.constant 0 : index
    %3 = vector.load %arg10[%c0, %c0_1] : memref<16x32xf32, #tpu.memory_space<vmem>>, vector<16x32xf32>
    %c0_2 = arith.constant 0 : index
    %c0_3 = arith.constant 0 : index
    %c0_4 = arith.constant 0 : index
    %4 = vector.load %arg5[%c0_2, %c0_3, %c0_4] : memref<1x32x32xf32, #tpu.memory_space<vmem>>, vector<1x32x32xf32>
    %5 = vector.shape_cast %4 : vector<1x32x32xf32> to vector<32x32xf32>
    %cst = arith.constant dense<0.000000e+00> : vector<16x32xf32>
    %6 = tpu.matmul %3, %5, %cst {dimension_numbers = #tpu.dot_dimension_numbers<[1], [0], [0], [1], [0, 0, 1, 1], [], []>} : vector<16x32xf32>, vector<32x32xf32>, vector<16x32xf32> -> vector<16x32xf32>
    %7 = arith.index_cast %arg1 : i32 to index
    %c0_5 = arith.constant 0 : index
    %8 = vector.load %arg6[%7, %c0_5] : memref<2x32xf32, #tpu.memory_space<vmem>>, vector<1x32xf32>
    %9 = vector.broadcast %8 : vector<1x32xf32> to vector<16x32xf32>
    %10 = arith.addf %6, %9 : vector<16x32xf32>
    %cst_6 = arith.constant 0.000000e+00 : f32
    %11 = vector.broadcast %cst_6 : f32 to vector<16x32xf32>
    %12 = arith.maximumf %10, %11 : vector<16x32xf32>
    %c0_7 = arith.constant 0 : index
    %c0_8 = arith.constant 0 : index
    %13 = vector.load %arg10[%c0_7, %c0_8] : memref<16x32xf32, #tpu.memory_space<vmem>>, vector<16x32xf32>
    tpu.vector_store %arg10[%c0_7, %c0_8], %12 {strides = array<i32>} : memref<16x32xf32, #tpu.memory_space<vmem>>, vector<16x32xf32>,
    %c1_i32 = arith.constant 1 : i32
    %14 = arith.cmpi eq, %arg1, %c1_i32 : i32
    %15 = arith.extui %14 : i1 to i32
    %c0_i32_9 = arith.constant 0 : i32
    %16 = arith.cmpi ne, %15, %c0_i32_9 : i32
    scf.if %16 {
      %c0_10 = arith.constant 0 : index
      %c0_11 = arith.constant 0 : index
      %17 = vector.load %arg10[%c0_10, %c0_11] : memref<16x32xf32, #tpu.memory_space<vmem>>, vector<16x32xf32>
      %c0_12 = arith.constant 0 : index
      %c0_13 = arith.constant 0 : index
      %18 = vector.load %arg7[%c0_12, %c0_13] : memref<1x32xf32, #tpu.memory_space<vmem>>, vector<1x32xf32>
      %19 = vector.broadcast %18 : vector<1x32xf32> to vector<16x32xf32>
      %20 = arith.mulf %17, %19 : vector<16x32xf32>
      %cst_14 = arith.constant dense<0.000000e+00> : vector<16xf32>
      %21 = vector.multi_reduction <add>, %20, %cst_14 [1] : vector<16x32xf32> to vector<16xf32>
      %c0_15 = arith.constant 0 : index
      %c0_16 = arith.constant 0 : index
      %22 = memref.load %arg8[%c0_15, %c0_16] : memref<1x1xf32, #tpu.memory_space<smem>>
      %23 = vector.broadcast %22 : f32 to vector<16xf32>
      %24 = arith.addf %21, %23 : vector<16xf32>
      %25 = arith.negf %24 : vector<16xf32>
      %26 = math.exp %25 : vector<16xf32>
      %cst_17 = arith.constant 1.000000e+00 : f32
      %27 = vector.broadcast %cst_17 : f32 to vector<16xf32>
      %28 = arith.addf %27, %26 : vector<16xf32>
      %29 = arith.divf %27, %28 : vector<16xf32>
      %30 = vector.shape_cast %29 : vector<16xf32> to vector<1x16xf32>
      %c0_18 = arith.constant 0 : index
      %c0_19 = arith.constant 0 : index
      %31 = vector.load %arg9[%c0_18, %c0_19] : memref<1x16xf32, #tpu.memory_space<vmem>>, vector<1x16xf32>
      tpu.vector_store %arg9[%c0_18, %c0_19], %30 {strides = array<i32>} : memref<1x16xf32, #tpu.memory_space<vmem>>, vector<1x16xf32>,
    } else {
    }
    return
  }
  func.func @transform_0(%arg0: i32, %arg1: i32) -> (i32, i32) {
    %c0_i32 = arith.constant 0 : i32
    %c0_i32_0 = arith.constant 0 : i32
    return %arg0, %c0_i32 : i32, i32
  }
  func.func @transform_1(%arg0: i32, %arg1: i32) -> (i32, i32) {
    %c0_i32 = arith.constant 0 : i32
    %c0_i32_0 = arith.constant 0 : i32
    %c0_i32_1 = arith.constant 0 : i32
    return %c0_i32, %c0_i32_0 : i32, i32
  }
  func.func @transform_2(%arg0: i32, %arg1: i32) -> (i32, i32) {
    %c0_i32 = arith.constant 0 : i32
    %c0_i32_0 = arith.constant 0 : i32
    %c0_i32_1 = arith.constant 0 : i32
    return %c0_i32, %c0_i32_0 : i32, i32
  }
  func.func @transform_3(%arg0: i32, %arg1: i32) -> (i32, i32, i32) {
    %c0_i32 = arith.constant 0 : i32
    %c0_i32_0 = arith.constant 0 : i32
    %c0_i32_1 = arith.constant 0 : i32
    return %arg1, %c0_i32, %c0_i32_0 : i32, i32, i32
  }
  func.func @transform_4(%arg0: i32, %arg1: i32) -> (i32, i32) {
    %c0_i32 = arith.constant 0 : i32
    %c0_i32_0 = arith.constant 0 : i32
    %c0_i32_1 = arith.constant 0 : i32
    return %c0_i32, %c0_i32_0 : i32, i32
  }
  func.func @transform_5(%arg0: i32, %arg1: i32) -> (i32, i32) {
    %c0_i32 = arith.constant 0 : i32
    %c0_i32_0 = arith.constant 0 : i32
    %c0_i32_1 = arith.constant 0 : i32
    return %c0_i32, %c0_i32_0 : i32, i32
  }
  func.func @transform_6(%arg0: i32, %arg1: i32) -> (i32, i32) {
    %c0_i32 = arith.constant 0 : i32
    %c0_i32_0 = arith.constant 0 : i32
    %c0_i32_1 = arith.constant 0 : i32
    return %c0_i32, %c0_i32_0 : i32, i32
  }
  func.func @transform_7(%arg0: i32, %arg1: i32) -> (i32, i32) {
    %c0_i32 = arith.constant 0 : i32
    %c0_i32_0 = arith.constant 0 : i32
    return %c0_i32, %arg0 : i32, i32
  }
}

</mosaic_0001>

<llo_original>
// kernel: tpu_custom_call.1
$region0: #{tpu_custom_call.1}
  #allocation0 [shape = 'u32[]', space=smem, size = 0x4, offset = 0x4, fixed_abs, tag = 'smem constant byte address 0x4 - core index']
  #allocation1 [shape = 'u32[144,128]{1,0:T(1,128)}', space=vmem, size = 0x12000, scoped, tag = 'internal scratch']
  #allocation2 [shape = 'f32[16,32]{1,0:T(8,128)}', space=vmem, size = 0x2000, scoped, tag = 'scratch operand']
  #allocation3 [shape = 'f32[1,1]{1,0:T(1,128)S(6)}', space=smem, size = 0x200, scoped, tag = 'scoped memory for tpu_custom_call.1']
  %s0 = inlined_call_operand.hbm [shape: f32[16,32], index: 0, kind: input, shape index: {}]
  %s1 = inlined_call_operand.hbm [shape: f32[32,32], index: 1, kind: input, shape index: {}]
  %s2 = inlined_call_operand.vmem [shape: f32[1,32], index: 2, kind: input, shape index: {}]
  %s3 = inlined_call_operand.hbm [shape: f32[2,32,32], index: 3, kind: input, shape index: {}]
  %s4 = inlined_call_operand.vmem [shape: f32[2,32], index: 4, kind: input, shape index: {}]
  %s5 = inlined_call_operand.vmem [shape: f32[1,32], index: 5, kind: input, shape index: {}]
  %s6 = inlined_call_operand.<no memory space> [shape: f32[1,1], index: 6, kind: input, shape index: {}]
  %s7 = inlined_call_operand.hbm [shape: f32[1,16], index: 7, kind: output, shape index: {}]
  %s8 = sld [smem:[#allocation0]]
  $region81: #{tpu_custom_call.1} parent=0
    _
  %s10 = ssub.s32 1, %s8
  %s11 = scalar_select 0, %s10, %s8
  %12 = sst [smem:[#allocation3]] %s6
  $region1: #{tpu_custom_call.1} parent=0
    #allocation4 [shape = 'u8[8192]{0}', space=vmem, size = 0x2000, scoped, tag = 'input window, operand 0, single buffered']
    #allocation5 [shape = 's32[2]{0}', space=sflag, size = 0x8, scoped, tag = 'scoped memory for tpu_custom_call.1']
    #allocation6 [shape = 's32[2]{0}', space=sflag, size = 0x8, scoped, tag = 'scoped memory for tpu_custom_call.1']
    #allocation7 [shape = 'u8[16384]{0}', space=vmem, size = 0x4000, scoped, tag = 'input window, operand 1, single buffered']
    #allocation8 [shape = 's32[1]{0}', space=sflag, size = 0x4, scoped, tag = 'scoped memory for tpu_custom_call.1']
    #allocation9 [shape = 'u8[32768]{0}', space=vmem, size = 0x8000, scoped, tag = 'input window, operand 3']
    #allocation10 [shape = 'u8[512]{0}', space=vmem, size = 0x400, scoped, tag = 'output window, operand 0, single buffered']
    %13 = vsyncpa [#allocation5], 0
    %14 = vsyncpa [#allocation8], 0
    %15 = vsyncpa [#allocation6], 0
    loop: start=0, step=1, limit=4
    $region2: #{tpu_custom_call.1} parent=1 // loop_pre_header
      _
    $region3: #{tpu_custom_call.1} parent=1 // loop_header
      %s17 = sphi 0, %s21
      %p18 = scmp.ge.s32.totalorder %s17, 4
      %s24 = sphi 0, %s36
      %s25 = sphi 0, %s32
      %s26 = sphi 0, %s24
      %s27 = sphi 0, %s25
      %s28 = sphi 0, %s26
      %s29 = sphi 0, %s27
      %s39 = sphi 0, %s41
      %s42 = sphi 0, %s39
      %s43 = sphi 0, %s42
      %s59 = sphi 0, %s43
      %s63 = sphi 0, %s63
      %s65 = sphi 0, %s63
      %s66 = sphi 0, %s65
      %s80 = sphi 0, %s66
      %s84 = sphi 0, %s84
      %s86 = sphi 0, %s84
      %s87 = sphi 0, %s86
      %s101 = sphi 0, %s87
      %s107 = sphi 0, %s109
      %s110 = sphi 0, %s107
      %s111 = sphi 0, %s110
      %s127 = sphi 0, %s111
      %s131 = sphi 0, %s131
      %s133 = sphi 0, %s131
      %s134 = sphi 0, %s133
      %s148 = sphi 0, %s134
      %s152 = sphi 0, %s152
      %s154 = sphi 0, %s152
      %s155 = sphi 0, %s154
      %s169 = sphi 0, %s155
      %s173 = sphi 0, %s173
      %s175 = sphi 0, %s173
      %s176 = sphi 0, %s175
      %s190 = sphi 0, %s176
      %s196 = sphi 0, %s198
      %s199 = sphi 0, %s196
      %s200 = sphi 0, %s199
      %s216 = sphi 0, %s200
    $region4: #{tpu_custom_call.1} parent=1 // loop_header_branch
      %20 = sbr.rel (%p18) target = $region8
    $region5: #{tpu_custom_call.1} parent=1 // loop_body
      %s22 = ssub.s32 %s17, 1
      %s23 = ssub.s32 %s17, 2
      %s30 = sadd.s32 1, %s25
      %p31 = scmp.ge.s32.totalorder %s30, 2
      %s32 = scalar_select %p31, 0, %s30
      %s33 = sadd.s32 1, %s24
      %s34 = scalar_select %p31, %s33, %s24
      %p35 = scmp.ge.s32.totalorder %s34, 1
      %s36 = scalar_select %p35, 0, %s34
      %s37 = ssub.s32 %s24, %s36
      %p38 = scmp.eq.s32.totalorder %s37, 0
      %s40 = sadd.s32 %s39, 1
      %s41 = scalar_select %p38, %s39, %s40
      %p44 = pneg %p38
      %p45 = scmp.eq.s32.totalorder %s17, 1
      %p46 = por %p44, %p45
      %p47 = scmp.ne.s32.totalorder %s39, %s42
      %p48 = scmp.eq.s32.totalorder %s17, 0
      %p49 = por %p47, %p48
      %p50 = scmp.ne.s32.totalorder %s39, %s42
      %p51 = scmp.eq.s32.totalorder %s22, 1
      %p52 = por %p50, %p51
      %p53 = scmp.ne.s32.totalorder %s42, %s43
      %p54 = scmp.eq.s32.totalorder %s22, 0
      %p55 = por %p53, %p54
      %p56 = scmp.ne.s32.totalorder %s42, %s43
      %p57 = scmp.eq.s32.totalorder %s23, 1
      %p58 = por %p56, %p57
      %p60 = scmp.ne.s32.totalorder %s43, %s59
      %p61 = scmp.eq.s32.totalorder %s23, 0
      %p62 = por %p60, %p61
      %s64 = sadd.s32 %s63, 1
      %p67 = scmp.eq.s32.totalorder %s17, 1
      %p68 = scmp.ne.s32.totalorder %s63, %s65
      %p69 = scmp.eq.s32.totalorder %s17, 0
      %p70 = por %p68, %p69
      %p71 = scmp.ne.s32.totalorder %s63, %s65
      %p72 = scmp.eq.s32.totalorder %s22, 1
      %p73 = por %p71, %p72
      %p74 = scmp.ne.s32.totalorder %s65, %s66
      %p75 = scmp.eq.s32.totalorder %s22, 0
      %p76 = por %p74, %p75
      %p77 = scmp.ne.s32.totalorder %s65, %s66
      %p78 = scmp.eq.s32.totalorder %s23, 1
      %p79 = por %p77, %p78
      %p81 = scmp.ne.s32.totalorder %s66, %s80
      %p82 = scmp.eq.s32.totalorder %s23, 0
      %p83 = por %p81, %p82
      %s85 = sadd.s32 %s84, 1
      %p88 = scmp.eq.s32.totalorder %s17, 1
      %p89 = scmp.ne.s32.totalorder %s84, %s86
      %p90 = scmp.eq.s32.totalorder %s17, 0
      %p91 = por %p89, %p90
      %p92 = scmp.ne.s32.totalorder %s84, %s86
      %p93 = scmp.eq.s32.totalorder %s22, 1
      %p94 = por %p92, %p93
      %p95 = scmp.ne.s32.totalorder %s86, %s87
      %p96 = scmp.eq.s32.totalorder %s22, 0
      %p97 = por %p95, %p96
      %p98 = scmp.ne.s32.totalorder %s86, %s87
      %p99 = scmp.eq.s32.totalorder %s23, 1
      %p100 = por %p98, %p99
      %p102 = scmp.ne.s32.totalorder %s87, %s101
      %p103 = scmp.eq.s32.totalorder %s23, 0
      %p104 = por %p102, %p103
      %s105 = ssub.s32 %s25, %s32
      %p106 = scmp.eq.s32.totalorder %s105, 0
      %s108 = sadd.s32 %s107, 1
      %s109 = scalar_select %p106, %s107, %s108
      %p112 = pneg %p106
      %p113 = scmp.eq.s32.totalorder %s17, 1
      %p114 = por %p112, %p113
      %p115 = scmp.ne.s32.totalorder %s107, %s110
      %p116 = scmp.eq.s32.totalorder %s17, 0
      %p117 = por %p115, %p116
      %p118 = scmp.ne.s32.totalorder %s107, %s110
      %p119 = scmp.eq.s32.totalorder %s22, 1
      %p120 = por %p118, %p119
      %p121 = scmp.ne.s32.totalorder %s110, %s111
      %p122 = scmp.eq.s32.totalorder %s22, 0
      %p123 = por %p121, %p122
      %p124 = scmp.ne.s32.totalorder %s110, %s111
      %p125 = scmp.eq.s32.totalorder %s23, 1
      %p126 = por %p124, %p125
      %p128 = scmp.ne.s32.totalorder %s111, %s127
      %p129 = scmp.eq.s32.totalorder %s23, 0
      %p130 = por %p128, %p129
      %s132 = sadd.s32 %s131, 1
      %p135 = scmp.eq.s32.totalorder %s17, 1
      %p136 = scmp.ne.s32.totalorder %s131, %s133
      %p137 = scmp.eq.s32.totalorder %s17, 0
      %p138 = por %p136, %p137
      %p139 = scmp.ne.s32.totalorder %s131, %s133
      %p140 = scmp.eq.s32.totalorder %s22, 1
      %p141 = por %p139, %p140
      %p142 = scmp.ne.s32.totalorder %s133, %s134
      %p143 = scmp.eq.s32.totalorder %s22, 0
      %p144 = por %p142, %p143
      %p145 = scmp.ne.s32.totalorder %s133, %s134
      %p146 = scmp.eq.s32.totalorder %s23, 1
      %p147 = por %p145, %p146
      %p149 = scmp.ne.s32.totalorder %s134, %s148
      %p150 = scmp.eq.s32.totalorder %s23, 0
      %p151 = por %p149, %p150
      %s153 = sadd.s32 %s152, 1
      %p156 = scmp.eq.s32.totalorder %s17, 1
      %p157 = scmp.ne.s32.totalorder %s152, %s154
      %p158 = scmp.eq.s32.totalorder %s17, 0
      %p159 = por %p157, %p158
      %p160 = scmp.ne.s32.totalorder %s152, %s154
      %p161 = scmp.eq.s32.totalorder %s22, 1
      %p162 = por %p160, %p161
      %p163 = scmp.ne.s32.totalorder %s154, %s155
      %p164 = scmp.eq.s32.totalorder %s22, 0
      %p165 = por %p163, %p164
      %p166 = scmp.ne.s32.totalorder %s154, %s155
      %p167 = scmp.eq.s32.totalorder %s23, 1
      %p168 = por %p166, %p167
      %p170 = scmp.ne.s32.totalorder %s155, %s169
      %p171 = scmp.eq.s32.totalorder %s23, 0
      %p172 = por %p170, %p171
      %s174 = sadd.s32 %s173, 1
      %p177 = scmp.eq.s32.totalorder %s17, 1
      %p178 = scmp.ne.s32.totalorder %s173, %s175
      %p179 = scmp.eq.s32.totalorder %s17, 0
      %p180 = por %p178, %p179
      %p181 = scmp.ne.s32.totalorder %s173, %s175
      %p182 = scmp.eq.s32.totalorder %s22, 1
      %p183 = por %p181, %p182
      %p184 = scmp.ne.s32.totalorder %s175, %s176
      %p185 = scmp.eq.s32.totalorder %s22, 0
      %p186 = por %p184, %p185
      %p187 = scmp.ne.s32.totalorder %s175, %s176
      %p188 = scmp.eq.s32.totalorder %s23, 1
      %p189 = por %p187, %p188
      %p191 = scmp.ne.s32.totalorder %s176, %s190
      %p192 = scmp.eq.s32.totalorder %s23, 0
      %p193 = por %p191, %p192
      %s194 = ssub.s32 %s24, %s36
      %p195 = scmp.eq.s32.totalorder %s194, 0
      %s197 = sadd.s32 %s196, 1
      %s198 = scalar_select %p195, %s196, %s197
      %p201 = pneg %p195
      %p202 = scmp.eq.s32.totalorder %s17, 1
      %p203 = por %p201, %p202
      %p204 = scmp.ne.s32.totalorder %s196, %s199
      %p205 = scmp.eq.s32.totalorder %s17, 0
      %p206 = por %p204, %p205
      %p207 = scmp.ne.s32.totalorder %s196, %s199
      %p208 = scmp.eq.s32.totalorder %s22, 1
      %p209 = por %p207, %p208
      %p210 = scmp.ne.s32.totalorder %s199, %s200
      %p211 = scmp.eq.s32.totalorder %s22, 0
      %p212 = por %p210, %p211
      %p213 = scmp.ne.s32.totalorder %s199, %s200
      %p214 = scmp.eq.s32.totalorder %s23, 1
      %p215 = por %p213, %p214
      %p217 = scmp.ne.s32.totalorder %s200, %s216
      %p218 = scmp.eq.s32.totalorder %s23, 0
      %p219 = por %p217, %p218
      %p220 = scmp.le.s32.totalorder 1, %s17
      %p221 = scmp.lt.s32.totalorder %s17, 3
      %p222 = pnand %p220, %p221
      %p223 = pneg %p222
      // Predicated region
      $region9: #{tpu_custom_call.1} parent=5 // pred_check
        _
      $region10: #{tpu_custom_call.1} parent=5 // pred_check_branch
        %225 = sbr.rel (%p222) target = $region12
      $region11: #{tpu_custom_call.1} parent=5 // pred_region
        %s226 = ssub.s32 %s17, 1
        // Predicated region
        $region13: #{tpu_custom_call.1} parent=11 // pred_check
          %p227 = pneg %p55
        $region14: #{tpu_custom_call.1} parent=11 // pred_check_branch
          %229 = sbr.rel (%p227) target = $region16
        $region15: #{tpu_custom_call.1} parent=11 // pred_region
          %s230 = smul.u32 2, %s26
          %s232 = ssub.s32 256, 256
          %233 = vsyncadd [#allocation5], %s232
          %s234 = smul.addr %s230, 128
          %s235 = scalar_lea.hbm %s0, %s234
          %s236 = sshll.u32 [#allocation4], 4
          %s237 = int_to_ptr.vmem [resolvable:$true] %s236
          %242 = dma.hbm_to_vmem [thread:$0]  %s235, 256, %s237, [#allocation5], 128, 128, 8
        $region16: #{tpu_custom_call.1} parent=11 // pred_fallthru
          _
        // Predicated region
        $region17: #{tpu_custom_call.1} parent=11 // pred_check
          %p243 = pneg %p76
        $region18: #{tpu_custom_call.1} parent=11 // pred_check_branch
          %245 = sbr.rel (%p243) target = $region20
        $region19: #{tpu_custom_call.1} parent=11 // pred_region
          %s247 = ssub.s32 512, 512
          %248 = vsyncadd [#allocation8], %s247
          %s249 = sshll.u32 [#allocation7], 4
          %s250 = int_to_ptr.vmem [resolvable:$true] %s249
          %255 = dma.hbm_to_vmem [thread:$0]  %s1, 512, %s250, [#allocation8], 128, 128, 8
        $region20: #{tpu_custom_call.1} parent=11 // pred_fallthru
          _
        // Predicated region
        $region21: #{tpu_custom_call.1} parent=11 // pred_check
          %p256 = pneg %p97
        $region22: #{tpu_custom_call.1} parent=11 // pred_check_branch
          %258 = sbr.rel (%p256) target = $region24
        $region23: #{tpu_custom_call.1} parent=11 // pred_region
          _
        $region24: #{tpu_custom_call.1} parent=11 // pred_fallthru
          _
        // Predicated region
        $region25: #{tpu_custom_call.1} parent=11 // pred_check
          %p259 = pneg %p144
        $region26: #{tpu_custom_call.1} parent=11 // pred_check_branch
          %261 = sbr.rel (%p259) target = $region28
        $region27: #{tpu_custom_call.1} parent=11 // pred_region
          _
        $region28: #{tpu_custom_call.1} parent=11 // pred_fallthru
          _
        // Predicated region
        $region29: #{tpu_custom_call.1} parent=11 // pred_check
          %p262 = pneg %p165
        $region30: #{tpu_custom_call.1} parent=11 // pred_check_branch
          %264 = sbr.rel (%p262) target = $region32
        $region31: #{tpu_custom_call.1} parent=11 // pred_region
          _
        $region32: #{tpu_custom_call.1} parent=11 // pred_fallthru
          _
        // Predicated region
        $region33: #{tpu_custom_call.1} parent=11 // pred_check
          %p265 = pneg %p186
        $region34: #{tpu_custom_call.1} parent=11 // pred_check_branch
          %267 = sbr.rel (%p265) target = $region36
        $region35: #{tpu_custom_call.1} parent=11 // pred_region
          _
        $region36: #{tpu_custom_call.1} parent=11 // pred_fallthru
          _
      $region12: #{tpu_custom_call.1} parent=5 // pred_fallthru
        _
      %p268 = scmp.lt.s32.totalorder %s17, 2
      // Predicated region
      $region37: #{tpu_custom_call.1} parent=5 // pred_check
        %p269 = pneg %p268
      $region38: #{tpu_custom_call.1} parent=5 // pred_check_branch
        %271 = sbr.rel (%p269) target = $region40
      $region39: #{tpu_custom_call.1} parent=5 // pred_region
        // Predicated region
        $region41: #{tpu_custom_call.1} parent=39 // pred_check
          %p272 = pneg %p117
        $region42: #{tpu_custom_call.1} parent=39 // pred_check_branch
          %274 = sbr.rel (%p272) target = $region44
        $region43: #{tpu_custom_call.1} parent=39 // pred_region
          %s275 = sand.u32 %s17, 1
          %s276 = scalar_lea.sflag [#allocation5], %s275
          %s277 = sand.u32 %s107, 1
          %s278 = smul.addr %s277, 32
          %s279 = scalar_lea.vmem [#allocation9], %s278
          %s281 = ssub.s32 512, 512
          %282 = vsyncadd %s276, %s281
          %s283 = smul.addr %s25, 4
          %s284 = smul.addr %s283, 128
          %s285 = scalar_lea.hbm %s3, %s284
          %s286 = sshll.u32 %s279, 4
          %s287 = int_to_ptr.vmem [resolvable:$true] %s286
          %292 = dma.hbm_to_vmem [thread:$0]  %s285, 512, %s287, %s276, 128, 128, 8
        $region44: #{tpu_custom_call.1} parent=39 // pred_fallthru
          _
      $region40: #{tpu_custom_call.1} parent=5 // pred_fallthru
        _
      %p293 = scmp.le.s32.totalorder 1, %s17
      %p294 = scmp.lt.s32.totalorder %s17, 3
      %p295 = pnand %p293, %p294
      %p296 = pneg %p295
      // Predicated region
      $region45: #{tpu_custom_call.1} parent=5 // pred_check
        _
      $region46: #{tpu_custom_call.1} parent=5 // pred_check_branch
        %298 = sbr.rel (%p295) target = $region48
      $region47: #{tpu_custom_call.1} parent=5 // pred_region
        %s299 = ssub.s32 %s17, 1
        // Predicated region
        $region49: #{tpu_custom_call.1} parent=47 // pred_check
          %p300 = pneg %p55
        $region50: #{tpu_custom_call.1} parent=47 // pred_check_branch
          %302 = sbr.rel (%p300) target = $region52
        $region51: #{tpu_custom_call.1} parent=47 // pred_region
          %303 = dma.done [#allocation5], 256
        $region52: #{tpu_custom_call.1} parent=47 // pred_fallthru
          _
        // Predicated region
        $region53: #{tpu_custom_call.1} parent=47 // pred_check
          %p304 = pneg %p76
        $region54: #{tpu_custom_call.1} parent=47 // pred_check_branch
          %306 = sbr.rel (%p304) target = $region56
        $region55: #{tpu_custom_call.1} parent=47 // pred_region
          %307 = dma.done [#allocation8], 512
        $region56: #{tpu_custom_call.1} parent=47 // pred_fallthru
          _
        %s308 = sand.u32 %s22, 1
        %s309 = scalar_lea.sflag [#allocation5], %s308
        %s310 = sand.u32 %s110, 1
        %s311 = smul.addr %s310, 32
        %s312 = scalar_lea.vmem [#allocation9], %s311
        // Predicated region
        $region57: #{tpu_custom_call.1} parent=47 // pred_check
          %p313 = pneg %p123
        $region58: #{tpu_custom_call.1} parent=47 // pred_check_branch
          %315 = sbr.rel (%p313) target = $region60
        $region59: #{tpu_custom_call.1} parent=47 // pred_region
          %316 = dma.done %s309, 512
        $region60: #{tpu_custom_call.1} parent=47 // pred_fallthru
          _
        %p317 = pneg %p55
        %p318 = pneg %p52
        %p319 = pneg %p76
        %p320 = pneg %p73
        %p321 = pneg %p97
        %p322 = pneg %p94
        %s323 = sand.u32 %s22, 1
        %s324 = scalar_lea.sflag [#allocation5], %s323
        %s325 = sand.u32 %s110, 1
        %s326 = smul.addr %s325, 32
        %s327 = scalar_lea.vmem [#allocation9], %s326
        %p328 = pneg %p123
        %p329 = pneg %p120
        %p330 = pneg %p144
        %p331 = pneg %p141
        %p332 = pneg %p165
        %p333 = pneg %p162
        %p334 = pneg %p186
        %p335 = pneg %p183
        %p336 = pneg %p212
        %p337 = pneg %p209
        %s338 = smul.u32 2, %s26
        %p339 = scmp.eq.s32.totalorder %s27, 0
        // Predicated region
        $region61: #{tpu_custom_call.1} parent=47 // pred_check
          %p340 = pneg %p339
        $region62: #{tpu_custom_call.1} parent=47 // pred_check_branch
          %342 = sbr.rel (%p340) target = $region64
        $region63: #{tpu_custom_call.1} parent=47 // pred_region
          %v343 = vld [vmem:[#allocation4] sm:$0xff]
          %v344 = vld [vmem:[#allocation4 + $0x8] sm:$0xff]
          %v345 = vld [vmem:[#allocation7] sm:$0xff]
          %v346 = vld [vmem:[#allocation7 + $0x8] sm:$0xff]
          %v347 = vld [vmem:[#allocation7 + $0x10] sm:$0xff]
          %v348 = vld [vmem:[#allocation7 + $0x18] sm:$0xff]
          %v349 = vld [vmem:[%s2] sm:$0x1]
          %v351 = vlaneseq
          %v352 = vshrl.u32 %v351, 7
          %v353 = vsub.s32 0, %v352
          %v354 = vrot.slane %v349, %v353
          %vm356 = vcmask 261120
          %v358 = vsel %vm356, %v343, 0
          %v361 = vsel %vm356, %v344, 0
          %363 = vmatprep.subr.mxu0 0.0
          %364 = vmatpush1.msra.mxu0 %v345
          %365 = vmatprep.subr.mxu0 0.0
          %366 = vmatpush1.msra.mxu0 %v346
          %367 = vmatprep.subr.mxu0 0.0
          %368 = vmatpush1.msra.mxu0 %v347
          %369 = vmatprep.subr.mxu0 0.0
          %370 = vmatpush1.msra.mxu0 %v348
          %371 = vmatprep.subr.mxu0 0.0
          %372 = vmatpush1.msra.mxu0 0.0
          %373 = vmatprep.subr.mxu0 0.0
          %374 = vmatpush1.msra.mxu0 0.0
          %375 = vmatprep.subr.mxu0 0.0
          %376 = vmatpush1.msra.mxu0 0.0
          %377 = vmatprep.subr.mxu0 0.0
          %378 = vmatpush1.msra.mxu0 0.0
          %379 = vmatprep.subr.mxu0 0.0
          %380 = vmatpush1.msra.mxu0 0.0
          %381 = vmatprep.subr.mxu0 0.0
          %382 = vmatpush1.msra.mxu0 0.0
          %383 = vmatprep.subr.mxu0 0.0
          %384 = vmatpush1.msra.mxu0 0.0
          %385 = vmatprep.subr.mxu0 0.0
          %386 = vmatpush1.msra.mxu0 0.0
          %387 = vmatprep.subr.mxu0 0.0
          %388 = vmatpush1.msra.mxu0 0.0
          %389 = vmatprep.subr.mxu0 0.0
          %390 = vmatpush1.msra.mxu0 0.0
          %391 = vmatprep.subr.mxu0 0.0
          %392 = vmatpush1.msra.mxu0 0.0
          %393 = vmatprep.subr.mxu0 0.0
          %394 = vmatpush1.msra.mxu0 0.0
          %395 = vmatprep.subr.mxu0 0.0
          %396 = vmatpush1.msra.mxu0 0.0
          %397 = vmatprep.subr.mxu0 0.0
          %398 = vmatpush1.msra.mxu0 0.0
          %399 = vmatprep.subr.mxu0 0.0
          %400 = vmatpush1.msra.mxu0 0.0
          %401 = vmatprep.subr.mxu0 0.0
          %402 = vmatpush1.msra.mxu0 0.0
          %403 = vmatprep.subr.mxu0 0.0
          %404 = vmatpush1.msra.mxu0 0.0
          %405 = vmatprep.subr.mxu0 0.0
          %406 = vmatpush1.msra.mxu0 0.0
          %407 = vmatprep.subr.mxu0 0.0
          %408 = vmatpush1.msra.mxu0 0.0
          %409 = vmatprep.subr.mxu0 0.0
          %410 = vmatpush1.msra.mxu0 0.0
          %411 = vmatprep.subr.mxu0 0.0
          %412 = vmatpush1.msra.mxu0 0.0
          %413 = vmatprep.subr.mxu0 0.0
          %414 = vmatpush1.msra.mxu0 0.0
          %415 = vmatprep.subr.mxu0 0.0
          %416 = vmatpush1.msra.mxu0 0.0
          %417 = vmatprep.subr.mxu0 0.0
          %418 = vmatpush1.msra.mxu0 0.0
          %419 = vmatprep.subr.mxu0 0.0
          %420 = vmatpush1.msra.mxu0 0.0
          %421 = vmatprep.subr.mxu0 0.0
          %422 = vmatpush1.msra.mxu0 0.0
          %423 = vmatprep.subr.mxu0 0.0
          %424 = vmatpush1.msra.mxu0 0.0
          %425 = vmatprep.subr.mxu0 0.0
          %426 = vmatpush1.msra.mxu0 0.0
          %427 = vmatprep.mubr.f32.mxu0 0.0
          %428 = vmatmul.mubr.f32.gmra.mrb[0].mxu0 %v358
          %v429 = vpop.f32.mrb[0].mxu0
          %v430 = vadd.f32 %v354, %v429
          %v431 = vpop.f32.mrb[0].mxu0
          %432 = vmatprep.mubr.f32.mxu0 0.0
          %433 = vmatmul.mubr.f32.gmra.mrb[0].mxu0 %v361
          %v434 = vpop.f32.mrb[0].mxu0
          %v435 = vadd.f32 %v354, %v434
          %v436 = vpop.f32.mrb[0].mxu0
          %437 = vdwg.mxu0
          %v438 = vmax.f32 %v430, 0.0
          %v439 = vmax.f32 %v435, 0.0
          %440 = vst.msk [vmem:[#allocation2] sm:$0xff] %vm356, %v438
          %441 = vst.msk [vmem:[#allocation2 + $0x8] sm:$0xff] %vm356, %v439
        $region64: #{tpu_custom_call.1} parent=47 // pred_fallthru
          _
        %v442 = vld [vmem:[#allocation2] sm:$0xff]
        %v443 = vld [vmem:[#allocation2 + $0x8] sm:$0xff]
        %v444 = vld [vmem:[%s312] sm:$0xff]
        %v445 = vld [vmem:[%s312 + $0x8] sm:$0xff]
        %v446 = vld [vmem:[%s312 + $0x10] sm:$0xff]
        %v447 = vld [vmem:[%s312 + $0x18] sm:$0xff]
        %s448 = scalar_lea.vmem %s4, %s27
        %v449 = vld [vmem:[%s448] sm:$0x1]
        %v450 = vlaneseq
        %v451 = vshrl.u32 %v450, 7
        %v452 = vsub.s32 0, %v451
        %v453 = vrot.slane %v449, %v452
        %vm454 = vcmask 261120
        %v456 = vsel %vm454, %v442, 0
        %v459 = vsel %vm454, %v443, 0
        %461 = vmatprep.subr.mxu0 0.0
        %462 = vmatpush1.msra.mxu0 %v444
        %463 = vmatprep.subr.mxu0 0.0
        %464 = vmatpush1.msra.mxu0 %v445
        %465 = vmatprep.subr.mxu0 0.0
        %466 = vmatpush1.msra.mxu0 %v446
        %467 = vmatprep.subr.mxu0 0.0
        %468 = vmatpush1.msra.mxu0 %v447
        %469 = vmatprep.subr.mxu0 0.0
        %470 = vmatpush1.msra.mxu0 0.0
        %471 = vmatprep.subr.mxu0 0.0
        %472 = vmatpush1.msra.mxu0 0.0
        %473 = vmatprep.subr.mxu0 0.0
        %474 = vmatpush1.msra.mxu0 0.0
        %475 = vmatprep.subr.mxu0 0.0
        %476 = vmatpush1.msra.mxu0 0.0
        %477 = vmatprep.subr.mxu0 0.0
        %478 = vmatpush1.msra.mxu0 0.0
        %479 = vmatprep.subr.mxu0 0.0
        %480 = vmatpush1.msra.mxu0 0.0
        %481 = vmatprep.subr.mxu0 0.0
        %482 = vmatpush1.msra.mxu0 0.0
        %483 = vmatprep.subr.mxu0 0.0
        %484 = vmatpush1.msra.mxu0 0.0
        %485 = vmatprep.subr.mxu0 0.0
        %486 = vmatpush1.msra.mxu0 0.0
        %487 = vmatprep.subr.mxu0 0.0
        %488 = vmatpush1.msra.mxu0 0.0
        %489 = vmatprep.subr.mxu0 0.0
        %490 = vmatpush1.msra.mxu0 0.0
        %491 = vmatprep.subr.mxu0 0.0
        %492 = vmatpush1.msra.mxu0 0.0
        %493 = vmatprep.subr.mxu0 0.0
        %494 = vmatpush1.msra.mxu0 0.0
        %495 = vmatprep.subr.mxu0 0.0
        %496 = vmatpush1.msra.mxu0 0.0
        %497 = vmatprep.subr.mxu0 0.0
        %498 = vmatpush1.msra.mxu0 0.0
        %499 = vmatprep.subr.mxu0 0.0
        %500 = vmatpush1.msra.mxu0 0.0
        %501 = vmatprep.subr.mxu0 0.0
        %502 = vmatpush1.msra.mxu0 0.0
        %503 = vmatprep.subr.mxu0 0.0
        %504 = vmatpush1.msra.mxu0 0.0
        %505 = vmatprep.subr.mxu0 0.0
        %506 = vmatpush1.msra.mxu0 0.0
        %507 = vmatprep.subr.mxu0 0.0
        %508 = vmatpush1.msra.mxu0 0.0
        %509 = vmatprep.subr.mxu0 0.0
        %510 = vmatpush1.msra.mxu0 0.0
        %511 = vmatprep.subr.mxu0 0.0
        %512 = vmatpush1.msra.mxu0 0.0
        %513 = vmatprep.subr.mxu0 0.0
        %514 = vmatpush1.msra.mxu0 0.0
        %515 = vmatprep.subr.mxu0 0.0
        %516 = vmatpush1.msra.mxu0 0.0
        %517 = vmatprep.subr.mxu0 0.0
        %518 = vmatpush1.msra.mxu0 0.0
        %519 = vmatprep.subr.mxu0 0.0
        %520 = vmatpush1.msra.mxu0 0.0
        %521 = vmatprep.subr.mxu0 0.0
        %522 = vmatpush1.msra.mxu0 0.0
        %523 = vmatprep.subr.mxu0 0.0
        %524 = vmatpush1.msra.mxu0 0.0
        %525 = vmatprep.mubr.f32.mxu0 0.0
        %526 = vmatmul.mubr.f32.gmra.mrb[0].mxu0 %v456
        %v527 = vpop.f32.mrb[0].mxu0
        %v528 = vadd.f32 %v453, %v527
        %v529 = vpop.f32.mrb[0].mxu0
        %530 = vmatprep.mubr.f32.mxu0 0.0
        %531 = vmatmul.mubr.f32.gmra.mrb[0].mxu0 %v459
        %v532 = vpop.f32.mrb[0].mxu0
        %v533 = vadd.f32 %v453, %v532
        %v534 = vpop.f32.mrb[0].mxu0
        %535 = vdwg.mxu0
        %v536 = vmax.f32 %v528, 0.0
        %v537 = vmax.f32 %v533, 0.0
        %538 = vst.msk [vmem:[#allocation2] sm:$0xff] %vm454, %v536
        %539 = vst.msk [vmem:[#allocation2 + $0x8] sm:$0xff] %vm454, %v537
        %p540 = scmp.eq.s32.totalorder %s27, 1
        // Predicated region
        $region65: #{tpu_custom_call.1} parent=47 // pred_check
          %p541 = pneg %p540
        $region66: #{tpu_custom_call.1} parent=47 // pred_check_branch
          %543 = sbr.rel (%p541) target = $region68
        $region67: #{tpu_custom_call.1} parent=47 // pred_region
          %v544 = vld [vmem:[#allocation2] sm:$0xff]
          %v545 = vld [vmem:[#allocation2 + $0x8] sm:$0xff]
          %v546 = vld [vmem:[%s5] sm:$0x1]
          %v548 = vlaneseq
          %v549 = vshrl.u32 %v548, 7
          %v550 = vsub.s32 0, %v549
          %v551 = vrot.slane %v546, %v550
          %v553 = vmul.f32 %v544, %v551
          %v554 = vmul.f32 %v545, %v551
          %v555 = vsel %vm454, %v553, 0.0
          %556 = vadd.xlane.f32.xlu0 %v555
          %v557 = vpop.xlane.xlu0 %556
          %v558 = vsel %vm454, %v554, 0.0
          %559 = vadd.xlane.f32.xlu0 %v558
          %v560 = vpop.xlane.xlu0 %559
          %s561 = sld [smem:[#allocation3]]
          %v562 = vstv %s561
          %v563 = vadd.f32 %v557, %v562
          %v564 = vadd.f32 %v560, %v562
          %v565 = vxor.u32 %v563, 2147483648
          %v566 = vxor.u32 %v564, 2147483648
          %v567 = vmul.f32 %v565, 1.442695
          %v568 = vpow.pop %v567
          %v569 = vmul.f32 %v566, 1.442695
          %v570 = vpow.pop %v569
          %v571 = vadd.f32 %v568, 1.0
          %v572 = vadd.f32 %v570, 1.0
          %v573 = vrcp.pop %v571
          %v574 = vmul.f32 1.0, %v573
          %v575 = vrcp.pop %v572
          %v576 = vmul.f32 1.0, %v575
          %v579 = vlaneseq
          %v580 = vand.u32 %v579, 127
          %v581 = vlaneseq
          %v582 = vshrl.u32 %v581, 7
          %v583 = vsub.s32 %v580, %v582
          %v584 = vrot.slane %v574, %v583
          %v585 = vadd.s32 %v580, 4294967288
          %v586 = vlaneseq
          %v587 = vshrl.u32 %v586, 7
          %v588 = vsub.s32 %v585, %v587
          %v589 = vrot.slane %v576, %v588
          %vm590 = vcmask 130112
          %v591 = vsel %vm590, %v589, %v584
          %vm593 = vcmask 122880
          %594 = vst.msk [vmem:[#allocation10] sm:$0x1] %vm593, %v591
        $region68: #{tpu_custom_call.1} parent=47 // pred_fallthru
          _
        // Predicated region
        $region69: #{tpu_custom_call.1} parent=47 // pred_check
          %p595 = pneg %p209
        $region70: #{tpu_custom_call.1} parent=47 // pred_check_branch
          %597 = sbr.rel (%p595) target = $region72
        $region71: #{tpu_custom_call.1} parent=47 // pred_region
          %s599 = ssub.s32 16, 16
          %600 = vsyncadd [#allocation6], %s599
          %s601 = smul.addr %s26, 16
          %s602 = scalar_lea.hbm %s7, %s601
          %s604 = sshll.u32 [#allocation10], 4
          %s605 = int_to_ptr.vmem [resolvable:$true] %s604
          %607 = dma.vmem_to_hbm [thread:$0]  %s605, 16, %s602, [#allocation6]
        $region72: #{tpu_custom_call.1} parent=47 // pred_fallthru
          _
        // Predicated region
        $region73: #{tpu_custom_call.1} parent=47 // pred_check
          %p608 = pneg %p209
        $region74: #{tpu_custom_call.1} parent=47 // pred_check_branch
          %610 = sbr.rel (%p608) target = $region76
        $region75: #{tpu_custom_call.1} parent=47 // pred_region
          %611 = dma.done [#allocation6], 16
        $region76: #{tpu_custom_call.1} parent=47 // pred_fallthru
          _
      $region48: #{tpu_custom_call.1} parent=5 // pred_fallthru
        _
      %p612 = scmp.le.s32.totalorder 2, %s17
      // Predicated region
      $region77: #{tpu_custom_call.1} parent=5 // pred_check
        %p613 = pneg %p612
      $region78: #{tpu_custom_call.1} parent=5 // pred_check_branch
        %615 = sbr.rel (%p613) target = $region80
      $region79: #{tpu_custom_call.1} parent=5 // pred_region
        %s616 = ssub.s32 %s17, 2
      $region80: #{tpu_custom_call.1} parent=5 // pred_fallthru
        _
    $region6: #{tpu_custom_call.1} parent=1 // loop_footer
      %s21 = sadd.s32 1, %s17
    $region7: #{tpu_custom_call.1} parent=1 // loop_footer_branch
      %16 = sbr.rel target = $region3
    $region8: #{tpu_custom_call.1} parent=1 // loop_exit
      _
    %617 = vsyncpa [#allocation5], 1
    %s618 = scalar_lea.sflag [#allocation5], 1
    %619 = vsyncpa %s618, 1
    %620 = vsyncpa [#allocation8], 1
    %621 = vsyncpa [#allocation6], 1
    %s622 = scalar_lea.sflag [#allocation6], 1
    %623 = vsyncpa %s622, 1

</llo_original>
